<compile_context>
chip_gen: v5e
topology: v5e:2x2
jax: 0.10.0
libtpu: 0.0.40
codegen_flags: <defaults>
</compile_context>

<pallas_src>
import numpy as np
import jax
import jax.numpy as jnp
from jax.experimental import pallas as pl
from jax.experimental.pallas import tpu as pltpu

_LANE = 128
_SUBLANE = 8
_VMEM_LIMIT = 32 * 1024 * 1024        # safe on v5e/v6e (128 MiB) and v7x (64 MiB)
_TILE_BUDGET = 12 << 20               # bytes of tile-proportional VMEM buffers


def _round_up(x, m):
    return ((x + m - 1) // m) * m


def _pick_row_tile(n_rows, per_row_bytes, budget_bytes=_TILE_BUDGET, max_tile=1024):
    """Largest tile (multiple of 8, <= max_tile) whose pipelined buffers fit the budget."""
    tile = max_tile
    while tile > _SUBLANE and tile * per_row_bytes > budget_bytes:
        tile //= 2
    tile = max(tile, _SUBLANE)
    return min(tile, _round_up(n_rows, _SUBLANE))


# --------------------------------------------------------------------------
# Pallas kernels
# --------------------------------------------------------------------------

def _linear_bn_relu_kernel(x_ref, w_ref, shift_ref, o_ref):
    # x_ref: (tile, C_in) bf16, w_ref: (C_in, C_out_pad) bf16 (BN scale pre-folded)
    # shift_ref: (1, C_out_pad) f32, o_ref: (tile, C_out_pad) f32
    y = jnp.dot(x_ref[...], w_ref[...], preferred_element_type=jnp.float32)
    o_ref[...] = jnp.maximum(y + shift_ref[...], 0.0).astype(o_ref.dtype)


def _grouped_linear_bn_relu_maxpool_kernel(xg_ref, w_ref, shift_ref, o_ref):
    # xg_ref: (nsample, tile, 3 + C_in) bf16 (neighbor-major), w_ref: (3 + C_in, C_out_pad) bf16
    # shift_ref: (1, C_out_pad) f32, o_ref: (tile, C_out_pad) f32
    ns = xg_ref.shape[0]
    w = w_ref[...]
    # hoist the shift broadcast out of the unrolled neighbor loop (no CSE of broadcasts)
    shift = jnp.broadcast_to(shift_ref[...], (o_ref.shape[0], o_ref.shape[1]))

    # neighbor 0 initializes the running max (relu outputs are >= 0, max over ns >= 1 values)
    acc = jnp.maximum(
        jnp.dot(xg_ref[0], w, preferred_element_type=jnp.float32) + shift, 0.0)
    for j in range(1, ns):  # static unroll: nsample is a small compile-time constant
        y = jnp.maximum(
            jnp.dot(xg_ref[j], w, preferred_element_type=jnp.float32) + shift, 0.0)
        acc = jnp.maximum(acc, y)
    o_ref[...] = acc.astype(o_ref.dtype)


# --------------------------------------------------------------------------
# Wrappers
# --------------------------------------------------------------------------

def _fold_and_pad_params(w, scale, shift, cout, cout_p, compute_dtype):
    # fold BN scale into the weight columns; zero-pad C_out to a lane-dense multiple of 128
    w_f = (w * scale.reshape(1, cout)).astype(compute_dtype)
    w_p = jnp.zeros((w.shape[0], cout_p), compute_dtype).at[:, :cout].set(w_f)
    shift_p = jnp.zeros((1, cout_p), jnp.float32).at[:, :cout].set(
        shift.reshape(1, cout).astype(jnp.float32))
    return w_p, shift_p


def linear_bn_relu(x, w, scale, shift, *, compute_dtype=jnp.bfloat16):
    n, cin = x.shape
    cout = w.shape[1]
    cout_p = _round_up(cout, _LANE)
    w_p, shift_p = _fold_and_pad_params(w, scale, shift, cout, cout_p, compute_dtype)

    itemsize = np.dtype(compute_dtype).itemsize
    # double-buffered input rows + double-buffered f32 output rows
    per_row_bytes = 2 * cin * itemsize + 2 * cout_p * 4
    tile = _pick_row_tile(n, per_row_bytes)
    n_pad = _round_up(n, tile)

    x_c = x.astype(compute_dtype)
    if n_pad != n:
        x_c = jnp.zeros((n_pad, cin), compute_dtype).at[:n, :].set(x_c)

    out = pl.pallas_call(
        _linear_bn_relu_kernel,
        out_shape=jax.ShapeDtypeStruct((n_pad, cout_p), jnp.float32),
        grid=(n_pad // tile,),
        in_specs=[
            pl.BlockSpec((tile, cin), lambda i: (i, 0)),
            pl.BlockSpec((cin, cout_p), lambda i: (0, 0)),
            pl.BlockSpec((1, cout_p), lambda i: (0, 0)),
        ],
        out_specs=pl.BlockSpec((tile, cout_p), lambda i: (i, 0)),
        compiler_params=pltpu.CompilerParams(
            dimension_semantics=("parallel",),
            vmem_limit_bytes=_VMEM_LIMIT),
    )(x_c, w_p, shift_p)
    return out[:n, :cout]


def grouped_linear_bn_relu_maxpool(xg, w, scale, shift, *, compute_dtype=jnp.bfloat16):
    m, ns, f = xg.shape
    cout = w.shape[1]
    cout_p = _round_up(cout, _LANE)
    w_p, shift_p = _fold_and_pad_params(w, scale, shift, cout, cout_p, compute_dtype)

    itemsize = np.dtype(compute_dtype).itemsize
    # double-buffered grouped-input rows + double-buffered f32 output rows + f32 max accumulator
    per_row_bytes = 2 * ns * f * itemsize + 3 * cout_p * 4
    tile = _pick_row_tile(m, per_row_bytes)
    m_pad = _round_up(m, tile)

    xg_c = xg.astype(compute_dtype)
    if m_pad != m:
        xg_c = jnp.zeros((m_pad, ns, f), compute_dtype).at[:m].set(xg_c)
    # neighbor-major layout: each per-neighbor slice is a contiguous (tile, f) block in VMEM
    xg_t = jnp.transpose(xg_c, (1, 0, 2))  # (nsample, m_pad, f)

    out = pl.pallas_call(
        _grouped_linear_bn_relu_maxpool_kernel,
        out_shape=jax.ShapeDtypeStruct((m_pad, cout_p), jnp.float32),
        grid=(m_pad // tile,),
        in_specs=[
            pl.BlockSpec((ns, tile, f), lambda i: (0, i, 0)),
            pl.BlockSpec((f, cout_p), lambda i: (0, 0)),
            pl.BlockSpec((1, cout_p), lambda i: (0, 0)),
        ],
        out_specs=pl.BlockSpec((tile, cout_p), lambda i: (i, 0)),
        compiler_params=pltpu.CompilerParams(
            dimension_semantics=("parallel",),
            vmem_limit_bytes=_VMEM_LIMIT),
    )(xg_t, w_p, shift_p)
    return out[:m, :cout]


# --------------------------------------------------------------------------
# Plain-python glue: furthest point sampling and kNN query-and-group
# (replicates pointops.furthestsampling / pointops.queryandgroup semantics)
# --------------------------------------------------------------------------

def furthest_point_sampling(p, o, n_o):
    p = np.asarray(p)
    idx_all = []
    start, new_start = 0, 0
    for b in range(len(o)):
        end, n_end = int(o[b]), int(n_o[b])
        m = n_end - new_start
        pts = p[start:end]
        dist = np.full((pts.shape[0],), 1e10, dtype=np.float64)
        cur = 0  # pointops starts from the first point of each segment
        sel = np.zeros((m,), dtype=np.int64)
        for j in range(m):
            sel[j] = cur
            d = np.sum((pts - pts[cur]) ** 2, axis=1)
            dist = np.minimum(dist, d)
            cur = int(np.argmax(dist))
        idx_all.append(sel + start)
        start, new_start = end, n_end
    return np.concatenate(idx_all)


def query_and_group(nsample, p, n_p, x, o, n_o):
    # use_xyz=True: concat (relative xyz of kNN neighbors, neighbor features)
    p, n_p, x = np.asarray(p), np.asarray(n_p), np.asarray(x)
    groups = []
    start, n_start = 0, 0
    for b in range(len(o)):
        end, n_end = int(o[b]), int(n_o[b])
        pts, feats = p[start:end], x[start:end]
        q = n_p[n_start:n_end]
        d = np.sum((q[:, None, :] - pts[None, :, :]) ** 2, axis=-1)  # (m_b, n_b)
        nn = np.argsort(d, axis=1)[:, :nsample]                      # (m_b, nsample)
        g_xyz = pts[nn] - q[:, None, :]
        g_feat = feats[nn]
        groups.append(np.concatenate([g_xyz, g_feat], axis=-1).astype(np.float32))
        start, n_start = end, n_end
    return np.concatenate(groups, axis=0)  # (M, nsample, 3 + C)


# --------------------------------------------------------------------------
# TransitionDown module (deterministic synthetic parameters)
# --------------------------------------------------------------------------

class TransitionDown:
    def __init__(self, in_planes, out_planes, stride=1, nsample=16, key=None):
        self.stride, self.nsample = stride, nsample
        self.in_planes, self.out_planes = in_planes, out_planes
        key = jax.random.PRNGKey(0) if key is None else key
        k_w, k_g, k_b, k_m, k_v = jax.random.split(key, 5)
        lin_in = (3 + in_planes) if stride != 1 else in_planes
        # torch nn.Linear weight is (out, in); we store the transpose (in, out)
        self.w = (jax.random.normal(k_w, (lin_in, out_planes), jnp.float32)
                  * (1.0 / np.sqrt(lin_in)))
        # BatchNorm1d parameters + running stats (eval-mode semantics)
        gamma = 1.0 + 0.1 * jax.random.normal(k_g, (out_planes,), jnp.float32)
        beta = 0.1 * jax.random.normal(k_b, (out_planes,), jnp.float32)
        mean = 0.1 * jax.random.normal(k_m, (out_planes,), jnp.float32)
        var = jnp.abs(jax.random.normal(k_v, (out_planes,), jnp.float32)) + 0.5
        eps = 1e-5
        scale = gamma / jnp.sqrt(var + eps)
        shift = beta - mean * scale
        self.scale = scale
        self.shift = shift

    def __call__(self, pxo):
        p, x, o = pxo
        if self.stride != 1:
            o_np = np.asarray(o)
            n_o = [int(o_np[0]) // self.stride]
            count = n_o[0]
            for i in range(1, o_np.shape[0]):
                count += (int(o_np[i]) - int(o_np[i - 1])) // self.stride
                n_o.append(count)
            n_o_np = np.array(n_o, dtype=np.int32)
            idx = furthest_point_sampling(p, o_np, n_o_np)
            n_p = jnp.asarray(np.asarray(p)[idx, :])
            xg = jnp.asarray(query_and_group(self.nsample, p, n_p, x, o_np, n_o_np))
            x_out = grouped_linear_bn_relu_maxpool(xg, self.w, self.scale, self.shift)
            return [n_p, x_out, jnp.asarray(n_o_np)]
        else:
            x_out = linear_bn_relu(x, self.w, self.scale, self.shift)
            return [p, x_out, o]


# --------------------------------------------------------------------------

if __name__ == "__main__":
    key = jax.random.PRNGKey(0)
    k_p, k_x, k_m1, k_m2 = jax.random.split(key, 4)

    N, C_in, C_out = 32, 8, 16
    p = jax.random.normal(k_p, (N, 3), jnp.float32)
    x = jax.random.normal(k_x, (N, C_in), jnp.float32)
    o = jnp.array([16, 32], dtype=jnp.int32)  # 2 point clouds of 16 points each

    # stride == 1 branch: relu(bn(linear(x)))
    td1 = TransitionDown(C_in, C_out, stride=1, key=k_m1)
    p1, x1, o1 = td1([p, x, o])
    jax.block_until_ready(x1)
    assert x1.shape == (N, C_out)

    # stride != 1 branch: FPS + kNN group -> relu(bn(linear)) -> maxpool(nsample)
    td2 = TransitionDown(C_in, C_out, stride=4, nsample=4, key=k_m2)
    p2, x2, o2 = td2([p, x, o])
    jax.block_until_ready(x2)
    assert p2.shape == (8, 3) and x2.shape == (8, C_out) and np.asarray(o2).tolist() == [4, 8]

    print("KERNEL_OK")
</pallas_src>

<mosaic_0001>
module attributes {stable_mosaic.version = 11 : i64} {
  func.func @_linear_bn_relu_kernel(%arg0: i32, %arg1: memref<32x8xbf16, #tpu.memory_space<vmem>>, %arg2: memref<8x128xbf16, #tpu.memory_space<vmem>>, %arg3: memref<1x128xf32, #tpu.memory_space<vmem>>, %arg4: memref<32x128xf32, #tpu.memory_space<vmem>>) attributes {dimension_semantics = [#tpu.dimension_semantics<parallel>], iteration_bounds = array<i64: 1>, scalar_prefetch = 0 : i64, scratch_operands = 0 : i64, tpu.core_type = #tpu.core_type<tc>, window_params = [{transform_indices = @transform_0, window_bounds = array<i64: 32, 8>}, {pipeline_mode = #tpu.pipeline_mode<synchronous>, transform_indices = @transform_1, window_bounds = array<i64: 8, 128>}, {pipeline_mode = #tpu.pipeline_mode<synchronous>, transform_indices = @transform_2, window_bounds = array<i64: 1, 128>}, {transform_indices = @transform_3, window_bounds = array<i64: 32, 128>}]} {
    %c0 = arith.constant 0 : index
    %c0_0 = arith.constant 0 : index
    %0 = vector.load %arg1[%c0, %c0_0] : memref<32x8xbf16, #tpu.memory_space<vmem>>, vector<32x8xbf16>
    %c0_1 = arith.constant 0 : index
    %c0_2 = arith.constant 0 : index
    %1 = vector.load %arg2[%c0_1, %c0_2] : memref<8x128xbf16, #tpu.memory_space<vmem>>, vector<8x128xbf16>
    %cst = arith.constant dense<0.000000e+00> : vector<32x128xf32>
    %2 = tpu.matmul %0, %1, %cst {dimension_numbers = #tpu.dot_dimension_numbers<[1], [0], [0], [1], [0, 0, 1, 1], [], []>} : vector<32x8xbf16>, vector<8x128xbf16>, vector<32x128xf32> -> vector<32x128xf32>
    %c0_3 = arith.constant 0 : index
    %c0_4 = arith.constant 0 : index
    %3 = vector.load %arg3[%c0_3, %c0_4] : memref<1x128xf32, #tpu.memory_space<vmem>>, vector<1x128xf32>
    %4 = vector.broadcast %3 : vector<1x128xf32> to vector<32x128xf32>
    %5 = arith.addf %2, %4 : vector<32x128xf32>
    %cst_5 = arith.constant 0.000000e+00 : f32
    %6 = vector.broadcast %cst_5 : f32 to vector<32x128xf32>
    %7 = arith.maximumf %5, %6 : vector<32x128xf32>
    %c0_6 = arith.constant 0 : index
    %c0_7 = arith.constant 0 : index
    %8 = vector.load %arg4[%c0_6, %c0_7] : memref<32x128xf32, #tpu.memory_space<vmem>>, vector<32x128xf32>
    tpu.vector_store %arg4[%c0_6, %c0_7], %7 {strides = array<i32>} : memref<32x128xf32, #tpu.memory_space<vmem>>, vector<32x128xf32>,
    return
  }
  func.func @transform_0(%arg0: i32) -> (i32, i32) {
    %c0_i32 = arith.constant 0 : i32
    %c0_i32_0 = arith.constant 0 : i32
    return %arg0, %c0_i32 : i32, i32
  }
  func.func @transform_1(%arg0: i32) -> (i32, i32) {
    %c0_i32 = arith.constant 0 : i32
    %c0_i32_0 = arith.constant 0 : i32
    %c0_i32_1 = arith.constant 0 : i32
    return %c0_i32, %c0_i32_0 : i32, i32
  }
  func.func @transform_2(%arg0: i32) -> (i32, i32) {
    %c0_i32 = arith.constant 0 : i32
    %c0_i32_0 = arith.constant 0 : i32
    %c0_i32_1 = arith.constant 0 : i32
    return %c0_i32, %c0_i32_0 : i32, i32
  }
  func.func @transform_3(%arg0: i32) -> (i32, i32) {
    %c0_i32 = arith.constant 0 : i32
    %c0_i32_0 = arith.constant 0 : i32
    return %arg0, %c0_i32 : i32, i32
  }
}

</mosaic_0001>

<llo_original>
// kernel: tpu_custom_call.1
$region0: #{tpu_custom_call.1}
  #allocation0 [shape = 'u32[]', space=smem, size = 0x4, offset = 0x4, fixed_abs, tag = 'smem constant byte address 0x4 - core index']
  #allocation1 [shape = 'u32[72,128]{1,0:T(1,128)}', space=vmem, size = 0x9000, scoped, tag = 'internal scratch']
  %s0 = inlined_call_operand.vmem [shape: bf16[32,8], index: 0, kind: input, shape index: {}]
  %s1 = inlined_call_operand.vmem [shape: bf16[8,128], index: 1, kind: input, shape index: {}]
  %s2 = inlined_call_operand.vmem [shape: f32[1,128], index: 2, kind: input, shape index: {}]
  %s3 = inlined_call_operand.hbm [shape: f32[32,128], index: 3, kind: output, shape index: {}]
  %s4 = sld [smem:[#allocation0]]
  $region22: #{tpu_custom_call.1} parent=0
    _
  %s6 = ssub.s32 1, %s4
  %s7 = scalar_select 0, %s6, %s4
  $region1: #{tpu_custom_call.1} parent=0
    #allocation2 [shape = 'u8[16384]{0}', space=vmem, size = 0x4000, scoped, tag = 'output window, operand 0, single buffered']
    #allocation3 [shape = 's32[1]{0}', space=sflag, size = 0x4, scoped, tag = 'scoped memory for tpu_custom_call.1']
    %8 = vsyncpa [#allocation3], 0
    // Predicated region
    $region2: #{tpu_custom_call.1} parent=1 // pred_check
      _
    $region3: #{tpu_custom_call.1} parent=1 // pred_check_branch
      %10 = sbr.rel (0) target = $region5
    $region4: #{tpu_custom_call.1} parent=1 // pred_region
      _
    $region5: #{tpu_custom_call.1} parent=1 // pred_fallthru
      _
    // Predicated region
    $region6: #{tpu_custom_call.1} parent=1 // pred_check
      _
    $region7: #{tpu_custom_call.1} parent=1 // pred_check_branch
      %12 = sbr.rel (0) target = $region9
    $region8: #{tpu_custom_call.1} parent=1 // pred_region
      _
    $region9: #{tpu_custom_call.1} parent=1 // pred_fallthru
      _
    // Predicated region
    $region10: #{tpu_custom_call.1} parent=1 // pred_check
      _
    $region11: #{tpu_custom_call.1} parent=1 // pred_check_branch
      %14 = sbr.rel (0) target = $region13
    $region12: #{tpu_custom_call.1} parent=1 // pred_region
      _
    $region13: #{tpu_custom_call.1} parent=1 // pred_fallthru
      _
    %v16 = vld [vmem:[%s0] sm:$0xf]
    %v17 = vld [vmem:[%s0 + $0x4] sm:$0xf]
    %v18 = vld [vmem:[%s0 + $0x8] sm:$0xf]
    %v19 = vld [vmem:[%s0 + $0xc] sm:$0xf]
    %v20 = vld [vmem:[%s1] sm:$0xf]
    %v21 = vld [vmem:[%s2] sm:$0x1]
    %v23 = vperm.slane %v21, 0
    %v29 = vunpack.c.l.b16 %v16
    %v30 = vunpack.c.l.b16 %v17
    %v31 = vunpack.c.l.b16 %v18
    %v32 = vunpack.c.l.b16 %v19
    %v33 = vpack.c.b16 %v30, %v29
    %v34 = vpack.c.b16 %v32, %v31
    %vm35 = vcmask 64512
    %v37 = vsel %vm35, %v33, 0
    %v40 = vsel %vm35, %v34, 0
    %vm42 = vcmask 1043456
    %v44 = vsel %vm42, %v20, 0
    %46 = vmatpush.bf16.msra.mxu0 0
    %47 = vmatpush.bf16.msra.mxu0 0
    %48 = vmatpush.bf16.msra.mxu0 0
    %49 = vmatpush.bf16.msra.mxu0 0
    %50 = vmatpush.bf16.msra.mxu0 0
    %51 = vmatpush.bf16.msra.mxu0 0
    %52 = vmatpush.bf16.msra.mxu0 0
    %53 = vmatpush.bf16.msra.mxu0 %v44
    %54 = vmatmul.bf16.gmra.mxu0 %v37
    %v55 = vpop.f32.mrf.mxu0
    %v56 = vadd.f32 %v23, %v55
    %v57 = vpop.f32.mrf.mxu0
    %v58 = vadd.f32 %v23, %v57
    %59 = vmatmul.bf16.gmra.mxu0 %v40
    %v60 = vpop.f32.mrf.mxu0
    %v61 = vadd.f32 %v23, %v60
    %v62 = vpop.f32.mrf.mxu0
    %v63 = vadd.f32 %v23, %v62
    %64 = vdwg.mxu0
    %v65 = vmax.f32 %v56, 0.0
    %v66 = vmax.f32 %v58, 0.0
    %v67 = vmax.f32 %v61, 0.0
    %v68 = vmax.f32 %v63, 0.0
    %69 = vst [vmem:[#allocation2] sm:$0xff] %v65
    %70 = vst [vmem:[#allocation2 + $0x8] sm:$0xff] %v66
    %71 = vst [vmem:[#allocation2 + $0x10] sm:$0xff] %v67
    %72 = vst [vmem:[#allocation2 + $0x18] sm:$0xff] %v68
    // Predicated region
    $region14: #{tpu_custom_call.1} parent=1 // pred_check
      _
    $region15: #{tpu_custom_call.1} parent=1 // pred_check_branch
      %74 = sbr.rel (0) target = $region17
    $region16: #{tpu_custom_call.1} parent=1 // pred_region
      %76 = vsyncadd [#allocation3], 0
      %s77 = sshll.u32 [#allocation2], 4
      %s78 = int_to_ptr.vmem [resolvable:$true] %s77
      %s79 = sshll.u32 %s3, 4
      %s80 = int_to_ptr.hbm [resolvable:$true] %s79
      %85 = dma.vmem_to_hbm [thread:$0]  %s78, 512, %s80, [#allocation3], 128, 128, 8
    $region17: #{tpu_custom_call.1} parent=1 // pred_fallthru
      _
    // Predicated region
    $region18: #{tpu_custom_call.1} parent=1 // pred_check
      _
    $region19: #{tpu_custom_call.1} parent=1 // pred_check_branch
      %87 = sbr.rel (0) target = $region21
    $region20: #{tpu_custom_call.1} parent=1 // pred_region
      %89 = dma.done [#allocation3], 512
    $region21: #{tpu_custom_call.1} parent=1 // pred_fallthru
      _
    %90 = vsyncpa [#allocation3], 1

</llo_original>
